<compile_context>
chip_gen: v6e
topology: v6e:2x2x1
jax: 0.10.0
libtpu: 0.0.40
codegen_flags: <defaults>
</compile_context>

<pallas_src>
import jax
import jax.numpy as jnp
from jax.experimental import pallas as pl
from jax.experimental.pallas import tpu as pltpu


# 512x512 f32 tile = 1 MiB per buffer; double-buffered in + out = 4 MiB total,
# well inside every generation's scoped-VMEM default (16 MiB v5e, 32 MiB v6e/v7x).
_PREFERRED_TILE = 512
# Below this many elements, a single grid step over the whole batch is
# launch/step-overhead bound territory -> amortize everything in one step.
_SMALL_ELEMS = 512 * 1024


def _transpose_tile_kernel(x_ref, o_ref):
    # x_ref: (1, TS, TH) block  ->  o_ref: (1, TH, TS) block
    o_ref[...] = jnp.swapaxes(x_ref[...], 1, 2)


def _transpose_batch_kernel(x_ref, o_ref):
    # x_ref: (B, S, H)  ->  o_ref: (B, H, S)  (whole batch in one step)
    o_ref[...] = jnp.swapaxes(x_ref[...], 1, 2)


def _pick_tile(dim, preferred=_PREFERRED_TILE):
    """Largest multiple of 128 that divides `dim` and is <= preferred (None if impossible)."""
    if dim % 128 != 0:
        return None
    best = None
    t = 128
    cap = min(dim, preferred)
    while t <= cap:
        if dim % t == 0:
            best = t
        t += 128
    return best


def _whole_slab_transpose(x, per_batch):
    """Fallback: whole (S, H) slab per grid step (per_batch) or whole batch in one step."""
    B, S, H = x.shape
    if per_batch:
        grid = (B,)
        in_spec = pl.BlockSpec((1, S, H), lambda b: (b, 0, 0))
        out_spec = pl.BlockSpec((1, H, S), lambda b: (b, 0, 0))
        sem = ("parallel",)
        kernel = _transpose_tile_kernel
    else:
        grid = (1,)
        in_spec = pl.BlockSpec((B, S, H), lambda i: (0, 0, 0))
        out_spec = pl.BlockSpec((B, H, S), lambda i: (0, 0, 0))
        sem = ("arbitrary",)
        kernel = _transpose_batch_kernel
    return pl.pallas_call(
        kernel,
        out_shape=jax.ShapeDtypeStruct((B, H, S), x.dtype),
        grid_spec=pltpu.PrefetchScalarGridSpec(
            num_scalar_prefetch=0,
            grid=grid,
            in_specs=[in_spec],
            out_specs=out_spec,
        ),
        compiler_params=pltpu.CompilerParams(dimension_semantics=sem),
    )(x)


def pallas_transpose_12(x: jax.Array) -> jax.Array:
    """Swap axes 1 and 2 of a 3-D array (B, S, H) -> (B, H, S) via Pallas."""
    assert x.ndim == 3, "Pallas hot path implements Transpose(1, 2) on 3-D inputs"
    B, S, H = x.shape

    ts = _pick_tile(S)
    th = _pick_tile(H)
    small = (B * S * H) <= _SMALL_ELEMS

    if small or ts is None or th is None:
        # Tiny activations (the ms_encoder case) -> one step over the whole
        # batch.  Large-but-not-128-divisible shapes keep the per-batch slab.
        # TODO(synk): padded/partial-block tiling for large irregular S, H.
        return _whole_slab_transpose(x, per_batch=not small)

    # Tiled path: lane-dense output blocks, bounded VMEM, real pipelining.
    grid = (S // ts, H // th, B)  # S-tile axis leads -> shardable even if B is tiny
    return pl.pallas_call(
        _transpose_tile_kernel,
        out_shape=jax.ShapeDtypeStruct((B, H, S), x.dtype),
        grid_spec=pltpu.PrefetchScalarGridSpec(
            num_scalar_prefetch=0,
            grid=grid,
            in_specs=[pl.BlockSpec((1, ts, th), lambda i, j, b: (b, i, j))],
            # Block-index swap here performs the coarse transpose via DMA placement.
            out_specs=pl.BlockSpec((1, th, ts), lambda i, j, b: (b, j, i)),
        ),
        compiler_params=pltpu.CompilerParams(
            dimension_semantics=("parallel", "parallel", "parallel"),
        ),
    )(x)


class TransposePallas:
    """Mirror of the PyTorch Transpose module."""

    def __init__(self, dim1, dim2):
        self.dims = (dim1, dim2)

    def _one(self, x):
        if x.ndim == 3 and sorted(self.dims) == [1, 2]:
            return pallas_transpose_12(x)
        # General transpose is a pure layout op with no single clean Pallas
        # tiling for arbitrary ranks/dims; keep module semantics via XLA.
        # TODO(synk): extend the tiled Pallas path to arbitrary (dim1, dim2).
        return jnp.swapaxes(x, *self.dims)

    def __call__(self, *inputs):
        if len(inputs) == 1:
            return self._one(inputs[0])
        # PyTorch returns a generator; a tuple is the JAX-friendly analogue.
        return tuple(self._one(one) for one in inputs)


if __name__ == "__main__":
    key = jax.random.PRNGKey(0)
    k1, k2, k3 = jax.random.split(key, 3)

    mod = TransposePallas(1, 2)

    # --- ms_encoder-sized activations (small path, whole batch in one step) ---
    B, S, H = 2, 8, 32
    x = jax.random.normal(k1, (B, S, H), dtype=jnp.float32)
    y = jax.random.normal(k2, (B, S, H), dtype=jnp.float32)

    out_x = jax.block_until_ready(mod(x))
    assert out_x.shape == (B, H, S)
    assert jnp.allclose(out_x, jnp.swapaxes(x, 1, 2))

    out_x2, out_y2 = mod(x, y)
    jax.block_until_ready(out_x2)
    jax.block_until_ready(out_y2)
    assert jnp.allclose(out_x2, jnp.swapaxes(x, 1, 2))
    assert jnp.allclose(out_y2, jnp.swapaxes(y, 1, 2))

    # --- larger shape to exercise the tiled (lane-dense) path ---
    B2, S2, H2 = 2, 1024, 896
    z = jax.random.normal(k3, (B2, S2, H2), dtype=jnp.float32)
    out_z = jax.block_until_ready(mod(z))
    assert out_z.shape == (B2, H2, S2)
    assert jnp.allclose(out_z, jnp.swapaxes(z, 1, 2))

    print("KERNEL_OK")
</pallas_src>

<mosaic_0001>
module attributes {stable_mosaic.version = 11 : i64} {
  func.func @_transpose_batch_kernel(%arg0: i32, %arg1: memref<2x8x32xf32, #tpu.memory_space<vmem>>, %arg2: memref<2x32x8xf32, #tpu.memory_space<vmem>>) attributes {dimension_semantics = [#tpu.dimension_semantics<arbitrary>], iteration_bounds = array<i64: 1>, scalar_prefetch = 0 : i64, scratch_operands = 0 : i64, tpu.core_type = #tpu.core_type<tc>, window_params = [{pipeline_mode = #tpu.pipeline_mode<synchronous>, transform_indices = @transform_0, window_bounds = array<i64: 2, 8, 32>}, {pipeline_mode = #tpu.pipeline_mode<synchronous>, transform_indices = @transform_1, window_bounds = array<i64: 2, 32, 8>}]} {
    %c0 = arith.constant 0 : index
    %c0_0 = arith.constant 0 : index
    %c0_1 = arith.constant 0 : index
    %0 = vector.load %arg1[%c0, %c0_0, %c0_1] : memref<2x8x32xf32, #tpu.memory_space<vmem>>, vector<2x8x32xf32>
    %1 = tpu.transpose %0, [0, 2, 1] : vector<2x8x32xf32> -> vector<2x32x8xf32>
    %c0_2 = arith.constant 0 : index
    %c0_3 = arith.constant 0 : index
    %c0_4 = arith.constant 0 : index
    %2 = vector.load %arg2[%c0_2, %c0_3, %c0_4] : memref<2x32x8xf32, #tpu.memory_space<vmem>>, vector<2x32x8xf32>
    tpu.vector_store %arg2[%c0_2, %c0_3, %c0_4], %1 {strides = array<i32>} : memref<2x32x8xf32, #tpu.memory_space<vmem>>, vector<2x32x8xf32>,
    return
  }
  func.func @transform_0(%arg0: i32) -> (i32, i32, i32) {
    %c0_i32 = arith.constant 0 : i32
    %c0_i32_0 = arith.constant 0 : i32
    %c0_i32_1 = arith.constant 0 : i32
    %c0_i32_2 = arith.constant 0 : i32
    return %c0_i32, %c0_i32_0, %c0_i32_1 : i32, i32, i32
  }
  func.func @transform_1(%arg0: i32) -> (i32, i32, i32) {
    %c0_i32 = arith.constant 0 : i32
    %c0_i32_0 = arith.constant 0 : i32
    %c0_i32_1 = arith.constant 0 : i32
    %c0_i32_2 = arith.constant 0 : i32
    return %c0_i32, %c0_i32_0, %c0_i32_1 : i32, i32, i32
  }
}

</mosaic_0001>

<llo_original>
// kernel: tpu_custom_call.1
$region0: #{tpu_custom_call.1}
  #allocation0 [shape = 'u32[]', space=smem, size = 0x4, offset = 0x4, fixed_abs, tag = 'smem constant byte address 0x4 - core index']
  #allocation1 [shape = 'u32[144,128]{1,0:T(1,128)}', space=vmem, size = 0x12000, scoped, tag = 'internal scratch']
  %s0 = inlined_call_operand.hbm [shape: f32[2,8,32], index: 0, kind: input, shape index: {}]
  %s1 = inlined_call_operand.vmem [shape: f32[2,32,8], index: 1, kind: output, shape index: {}]
  %s2 = sld [smem:[#allocation0]]
  $region18: #{tpu_custom_call.1} parent=0
    _
  %s4 = ssub.s32 1, %s2
  %s5 = scalar_select 0, %s4, %s2
  $region1: #{tpu_custom_call.1} parent=0
    #allocation2 [shape = 'u8[8192]{0}', space=vmem, size = 0x2000, scoped, tag = 'input window, operand 0, single buffered']
    #allocation3 [shape = 's32[1]{0}', space=sflag, size = 0x4, scoped, tag = 'scoped memory for tpu_custom_call.1']
    %6 = vsyncpa [#allocation3], 0
    // Predicated region
    $region2: #{tpu_custom_call.1} parent=1 // pred_check
      _
    $region3: #{tpu_custom_call.1} parent=1 // pred_check_branch
      %8 = sbr.rel (0) target = $region5
    $region4: #{tpu_custom_call.1} parent=1 // pred_region
      %s10 = ssub.s32 256, 256
      %11 = vsyncadd [#allocation3], %s10
      %s12 = sshll.u32 [#allocation2], 4
      %s13 = int_to_ptr.vmem [resolvable:$true] %s12
      %18 = dma.hbm_to_vmem [thread:$0]  %s0, 256, %s13, [#allocation3], 128, 128, 8
    $region5: #{tpu_custom_call.1} parent=1 // pred_fallthru
      _
    // Predicated region
    $region6: #{tpu_custom_call.1} parent=1 // pred_check
      _
    $region7: #{tpu_custom_call.1} parent=1 // pred_check_branch
      %20 = sbr.rel (0) target = $region9
    $region8: #{tpu_custom_call.1} parent=1 // pred_region
      %21 = dma.done [#allocation3], 256
    $region9: #{tpu_custom_call.1} parent=1 // pred_fallthru
      _
    %v22 = vld [vmem:[#allocation2] sm:$0xff]
    %v23 = vld [vmem:[#allocation2 + $0x8] sm:$0xff]
    %24 = vxpose.xlu0.b32.start [1/16] %v22, 128
    %25 = vxpose.xlu0.b32.cont [2/16] 0.0, 128
    %26 = vxpose.xlu0.b32.cont [3/16] 0.0, 128
    %27 = vxpose.xlu0.b32.cont [4/16] 0.0, 128
    %28 = vxpose.xlu0.b32.cont [5/16] 0.0, 128
    %29 = vxpose.xlu0.b32.cont [6/16] 0.0, 128
    %30 = vxpose.xlu0.b32.cont [7/16] 0.0, 128
    %31 = vxpose.xlu0.b32.cont [8/16] 0.0, 128
    %32 = vxpose.xlu0.b32.cont [9/16] 0.0, 128
    %33 = vxpose.xlu0.b32.cont [10/16] 0.0, 128
    %34 = vxpose.xlu0.b32.cont [11/16] 0.0, 128
    %35 = vxpose.xlu0.b32.cont [12/16] 0.0, 128
    %36 = vxpose.xlu0.b32.cont [13/16] 0.0, 128
    %37 = vxpose.xlu0.b32.cont [14/16] 0.0, 128
    %38 = vxpose.xlu0.b32.cont [15/16] 0.0, 128
    %39 = vxpose.xlu0.b32.end [16/16] 0.0, 128
    %v40 = vpop.trf.xlu0
    %v41 = vpop.trf.xlu0
    %v42 = vpop.trf.xlu0
    %v43 = vpop.trf.xlu0
    %v44 = vpop.trf.xlu0
    %v45 = vpop.trf.xlu0
    %v46 = vpop.trf.xlu0
    %v47 = vpop.trf.xlu0
    %v48 = vpop.trf.xlu0
    %v49 = vpop.trf.xlu0
    %v50 = vpop.trf.xlu0
    %v51 = vpop.trf.xlu0
    %v52 = vpop.trf.xlu0
    %v53 = vpop.trf.xlu0
    %v54 = vpop.trf.xlu0
    %v55 = vpop.trf.xlu0
    %56 = vxpose.xlu0.b32.start [1/16] %v23, 128
    %57 = vxpose.xlu0.b32.cont [2/16] 0.0, 128
    %58 = vxpose.xlu0.b32.cont [3/16] 0.0, 128
    %59 = vxpose.xlu0.b32.cont [4/16] 0.0, 128
    %60 = vxpose.xlu0.b32.cont [5/16] 0.0, 128
    %61 = vxpose.xlu0.b32.cont [6/16] 0.0, 128
    %62 = vxpose.xlu0.b32.cont [7/16] 0.0, 128
    %63 = vxpose.xlu0.b32.cont [8/16] 0.0, 128
    %64 = vxpose.xlu0.b32.cont [9/16] 0.0, 128
    %65 = vxpose.xlu0.b32.cont [10/16] 0.0, 128
    %66 = vxpose.xlu0.b32.cont [11/16] 0.0, 128
    %67 = vxpose.xlu0.b32.cont [12/16] 0.0, 128
    %68 = vxpose.xlu0.b32.cont [13/16] 0.0, 128
    %69 = vxpose.xlu0.b32.cont [14/16] 0.0, 128
    %70 = vxpose.xlu0.b32.cont [15/16] 0.0, 128
    %71 = vxpose.xlu0.b32.end [16/16] 0.0, 128
    %v72 = vpop.trf.xlu0
    %v73 = vpop.trf.xlu0
    %v74 = vpop.trf.xlu0
    %v75 = vpop.trf.xlu0
    %v76 = vpop.trf.xlu0
    %v77 = vpop.trf.xlu0
    %v78 = vpop.trf.xlu0
    %v79 = vpop.trf.xlu0
    %v80 = vpop.trf.xlu0
    %v81 = vpop.trf.xlu0
    %v82 = vpop.trf.xlu0
    %v83 = vpop.trf.xlu0
    %v84 = vpop.trf.xlu0
    %v85 = vpop.trf.xlu0
    %v86 = vpop.trf.xlu0
    %v87 = vpop.trf.xlu0
    %vm88 = vcmask 64512
    %89 = vst.msk [vmem:[%s1] sm:$0xff] %vm88, %v40
    %90 = vst.msk [vmem:[%s1 + $0x8] sm:$0xff] %vm88, %v41
    %91 = vst.msk [vmem:[%s1 + $0x10] sm:$0xff] %vm88, %v42
    %92 = vst.msk [vmem:[%s1 + $0x18] sm:$0xff] %vm88, %v43
    %93 = vst.msk [vmem:[%s1 + $0x20] sm:$0xff] %vm88, %v72
    %94 = vst.msk [vmem:[%s1 + $0x28] sm:$0xff] %vm88, %v73
    %95 = vst.msk [vmem:[%s1 + $0x30] sm:$0xff] %vm88, %v74
    %96 = vst.msk [vmem:[%s1 + $0x38] sm:$0xff] %vm88, %v75
    // Predicated region
    $region10: #{tpu_custom_call.1} parent=1 // pred_check
      _
    $region11: #{tpu_custom_call.1} parent=1 // pred_check_branch
      %98 = sbr.rel (0) target = $region13
    $region12: #{tpu_custom_call.1} parent=1 // pred_region
      _
    $region13: #{tpu_custom_call.1} parent=1 // pred_fallthru
      _
    // Predicated region
    $region14: #{tpu_custom_call.1} parent=1 // pred_check
      _
    $region15: #{tpu_custom_call.1} parent=1 // pred_check_branch
      %100 = sbr.rel (0) target = $region17
    $region16: #{tpu_custom_call.1} parent=1 // pred_region
      _
    $region17: #{tpu_custom_call.1} parent=1 // pred_fallthru
      _
    %101 = vsyncpa [#allocation3], 1

</llo_original>
